<compile_context>
chip_gen: v5e
topology: v5e:2x2
jax: 0.10.0
libtpu: 0.0.40
codegen_flags: <defaults>
</compile_context>

<pallas_src>
import functools

import jax
import jax.numpy as jnp
from jax import lax
from jax.experimental import pallas as pl
from jax.experimental.pallas import tpu as pltpu

LANE = 128


def _round_up(x, m):
    return ((x + m - 1) // m) * m


# ----------------------- resident-A fused kernel (fast path) -----------------------

def _resident_gnn_kernel(a_ref, x_ref, w_ref, b_ref, o_ref, *, num_layers):
    """Single grid step; everything resident in VMEM, layer loop unrolled in-kernel.

    a_ref : [Np, Np]       bf16  normalized adjacency (DMA'd once)
    x_ref : [Np, Fp]       bf16  padded input features
    w_ref : [L+1, Fp, Fp]  bf16  stacked GCN weights + output Linear weight
    b_ref : [L+1, 1, Fp]   f32   stacked biases
    o_ref : [Np, Fp]       f32   padded output
    """
    a = a_ref[...]
    h = x_ref[...]
    for l in range(num_layers):                      # static unroll (num_layers small)
        xw = jnp.dot(h, w_ref[l], preferred_element_type=jnp.float32)
        acc = jnp.dot(a, xw.astype(jnp.bfloat16),
                      preferred_element_type=jnp.float32)
        # bias + ReLU in f32; dropout p=0.2 is identity in eval mode (training=False).
        h = jnp.maximum(acc + b_ref[l], 0.0).astype(jnp.bfloat16)
    out = jnp.dot(h, w_ref[num_layers],
                  preferred_element_type=jnp.float32) + b_ref[num_layers]
    o_ref[...] = out.astype(o_ref.dtype)


# ------------------- streaming-A kernel (fallback for large graphs) ----------------

def _streaming_gnn_kernel(a_ref, x_ref, w_ref, b_ref, o_ref, h_ref, acc_ref,
                          *, num_layers, tk, n_chunks):
    """Grid = (layer, k_stripe).  A_hat streamed as (Np, tk) column stripes."""
    l = pl.program_id(0)
    k = pl.program_id(1)
    nk = pl.num_programs(1)

    # Seed the resident activation with the input features (once, at layer 0).
    @pl.when(jnp.logical_and(l == 0, k == 0))
    def _():
        h_ref[...] = x_ref[...]

    # Init the f32 accumulator at the start of each layer's K reduction.
    @pl.when(k == 0)
    def _():
        acc_ref[...] = jnp.zeros_like(acc_ref)

    start = pl.multiple_of(k * tk, tk)
    h_stripe = h_ref[pl.ds(start, tk), :]                       # [tk, Fp] bf16
    w_l = w_ref[l]                                              # [Fp, Fp] bf16
    xw = jnp.dot(h_stripe, w_l, preferred_element_type=jnp.float32).astype(jnp.bfloat16)
    acc_ref[...] += jnp.dot(a_ref[...], xw, preferred_element_type=jnp.float32)

    # Finalize this layer: chunked bias + ReLU epilogue; fold the output Linear into
    # the very last step (also chunked) to bound vreg pressure.
    @pl.when(k == nk - 1)
    def _():
        b_l = b_ref[l]                                          # [1, Fp] f32

        def _epilogue(c, carry):
            off = pl.multiple_of(c * tk, tk)
            h_new = jnp.maximum(acc_ref[pl.ds(off, tk), :] + b_l, 0.0)
            h_ref[pl.ds(off, tk), :] = h_new.astype(jnp.bfloat16)
            return carry

        lax.fori_loop(0, n_chunks, _epilogue, 0)

        @pl.when(l == num_layers - 1)
        def _():
            w_out = w_ref[num_layers]                           # [Fp, Fp] bf16
            b_out = b_ref[num_layers]                           # [1, Fp]  f32

            def _out_chunk(c, carry):
                off = pl.multiple_of(c * tk, tk)
                h_c = h_ref[pl.ds(off, tk), :]
                out_c = jnp.dot(h_c, w_out, preferred_element_type=jnp.float32) + b_out
                o_ref[pl.ds(off, tk), :] = out_c.astype(o_ref.dtype)
                return carry

            lax.fori_loop(0, n_chunks, _out_chunk, 0)


# --------------------------------- JAX glue ----------------------------------------

def gcn_norm_dense(edge_index, edge_weight, num_nodes):
    """Dense D^{-1/2} (A + I) D^{-1/2}, matching torch_geometric GCNConv defaults."""
    src = edge_index[0]
    dst = edge_index[1]
    if edge_weight is None:
        edge_weight = jnp.ones(src.shape[0], dtype=jnp.float32)
    a = jnp.zeros((num_nodes, num_nodes), dtype=jnp.float32)
    a = a.at[dst, src].add(edge_weight)            # A[target, source]
    a = a + jnp.eye(num_nodes, dtype=jnp.float32)  # self-loops, fill_value=1
    deg = jnp.sum(a, axis=1)
    dinv = jnp.where(deg > 0.0, 1.0 / jnp.sqrt(deg), 0.0)
    return dinv[:, None] * a * dinv[None, :]


def init_params(key, input_dim, hidden_dim, output_dim, num_layers=3):
    params = {"gcn": []}
    dims = [input_dim] + [hidden_dim] * num_layers
    for layer in range(num_layers):
        key, sub = jax.random.split(key)
        fan_in, fan_out = dims[layer], dims[layer + 1]
        scale = jnp.sqrt(6.0 / (fan_in + fan_out))
        w = jax.random.uniform(sub, (fan_in, fan_out), jnp.float32, -scale, scale)
        b = jnp.zeros((1, fan_out), jnp.float32)
        params["gcn"].append((w, b))
    key, sub = jax.random.split(key)
    scale = jnp.sqrt(6.0 / (hidden_dim + output_dim))
    params["out_w"] = jax.random.uniform(
        sub, (hidden_dim, output_dim), jnp.float32, -scale, scale)
    params["out_b"] = jnp.zeros((1, output_dim), jnp.float32)
    return params


def _vmem_budget_bytes():
    """Device-aware VMEM budget (~85% of physical; leaves compiler headroom)."""
    try:
        cap = int(pltpu.get_tpu_info().vmem_capacity_bytes)
    except Exception:
        cap = 64 * 1024 * 1024
    return int(cap * 0.85)


def gnn_model_forward(params, x, edge_index, edge_weight=None):
    """Forward pass of GNNModel (eval mode), fused into one Pallas kernel."""
    n, f_in = x.shape
    hidden = params["gcn"][0][0].shape[1]
    out_dim = params["out_w"].shape[1]
    num_layers = len(params["gcn"])

    fp = _round_up(max(f_in, hidden, out_dim), LANE)
    np0 = _round_up(max(n, LANE), LANE)
    vmem_budget = _vmem_budget_bytes()

    # --- path selection: resident A (DMA'd once, single grid step) vs streamed A ---
    w_bytes = (num_layers + 1) * (fp * fp * 2 + fp * 4)
    resident_bytes = (np0 * np0 * 2                  # A bf16
                      + np0 * fp * (2 + 4 + 4 + 2)   # x(bf16), out(f32), acc tmp, h tmp
                      + w_bytes)
    use_resident = resident_bytes <= vmem_budget // 2

    if use_resident:
        np_, tk = np0, None
    else:
        # Streaming fallback: largest double-buffered bf16 (Np, tk) stripe that fits.
        other = np0 * fp * (2 + 2 + 4 + 2) + w_bytes     # x, h, acc, out(bf16)
        avail = max(vmem_budget - other - (8 << 20), 4 * np0 * 128)
        tk = 128
        for cand in (2048, 1024, 512, 256):
            if 4 * np0 * cand <= avail:                  # 2 bufs * Np * tk * 2 B
                tk = cand
                break
        np_ = _round_up(np0, tk)

    # Dense normalized adjacency (one-off plain-JAX glue), zero-padded, bf16.
    a_hat = gcn_norm_dense(edge_index, edge_weight, n)
    a_pad = jnp.zeros((np_, np_), jnp.float32).at[:n, :n].set(a_hat).astype(jnp.bfloat16)
    x_pad = jnp.zeros((np_, fp), jnp.float32).at[:n, :f_in].set(x).astype(jnp.bfloat16)

    # Stack GCN weights + the output Linear into [L+1, Fp, Fp] / [L+1, 1, Fp].
    w_stack, b_stack = [], []
    for (w, b) in params["gcn"]:
        w_stack.append(jnp.zeros((fp, fp), jnp.float32)
                       .at[:w.shape[0], :w.shape[1]].set(w))
        b_stack.append(jnp.zeros((1, fp), jnp.float32)
                       .at[:, :b.shape[-1]].set(b.reshape(1, -1)))
    w_stack.append(jnp.zeros((fp, fp), jnp.float32)
                   .at[:hidden, :out_dim].set(params["out_w"]))
    b_stack.append(jnp.zeros((1, fp), jnp.float32)
                   .at[:, :out_dim].set(params["out_b"].reshape(1, -1)))
    w_all = jnp.stack(w_stack).astype(jnp.bfloat16)   # [L+1, Fp, Fp] bf16
    b_all = jnp.stack(b_stack)                        # [L+1, 1, Fp]  f32

    if use_resident:
        kernel = functools.partial(_resident_gnn_kernel, num_layers=num_layers)
        out_pad = pl.pallas_call(
            kernel,
            out_shape=jax.ShapeDtypeStruct((np_, fp), jnp.float32),
            grid_spec=pltpu.PrefetchScalarGridSpec(
                num_scalar_prefetch=0,
                grid=(1,),
                in_specs=[
                    pl.BlockSpec((np_, np_), lambda i: (0, 0)),
                    pl.BlockSpec((np_, fp), lambda i: (0, 0)),
                    pl.BlockSpec((num_layers + 1, fp, fp), lambda i: (0, 0, 0)),
                    pl.BlockSpec((num_layers + 1, 1, fp), lambda i: (0, 0, 0)),
                ],
                out_specs=pl.BlockSpec((np_, fp), lambda i: (0, 0)),
            ),
            compiler_params=pltpu.CompilerParams(
                dimension_semantics=("arbitrary",),
                vmem_limit_bytes=vmem_budget,
            ),
        )(a_pad, x_pad, w_all, b_all)
    else:
        kt = np_ // tk
        kernel = functools.partial(_streaming_gnn_kernel, num_layers=num_layers,
                                   tk=tk, n_chunks=kt)
        single = pl.Buffered(1)   # constant-index blocks: no double-buffer -> save VMEM
        out_pad = pl.pallas_call(
            kernel,
            out_shape=jax.ShapeDtypeStruct((np_, fp), jnp.bfloat16),
            grid_spec=pltpu.PrefetchScalarGridSpec(
                num_scalar_prefetch=0,
                grid=(num_layers, kt),
                in_specs=[
                    # A_hat streamed as (Np, tk) column stripes (double-buffered DMA).
                    pl.BlockSpec((np_, tk), lambda l, k: (0, k)),
                    pl.BlockSpec((np_, fp), lambda l, k: (0, 0),
                                 pipeline_mode=single),
                    pl.BlockSpec((num_layers + 1, fp, fp), lambda l, k: (0, 0, 0),
                                 pipeline_mode=single),
                    pl.BlockSpec((num_layers + 1, 1, fp), lambda l, k: (0, 0, 0),
                                 pipeline_mode=single),
                ],
                out_specs=pl.BlockSpec((np_, fp), lambda l, k: (0, 0),
                                       pipeline_mode=single),
                scratch_shapes=[
                    pltpu.VMEM((np_, fp), jnp.bfloat16),   # activation across layers
                    pltpu.VMEM((np_, fp), jnp.float32),    # per-layer f32 accumulator
                ],
            ),
            compiler_params=pltpu.CompilerParams(
                dimension_semantics=("arbitrary", "arbitrary"),
                vmem_limit_bytes=vmem_budget,
            ),
        )(a_pad, x_pad, w_all, b_all)

    return out_pad[:n, :out_dim].astype(jnp.float32)


def gnn_model_forward_ref(params, x, edge_index, edge_weight=None):
    """Pure-JAX f32 reference (correctness check only)."""
    n = x.shape[0]
    a_hat = gcn_norm_dense(edge_index, edge_weight, n)
    h = x
    for (w, b) in params["gcn"]:
        h = jnp.maximum(a_hat @ (h @ w) + b, 0.0)
    return h @ params["out_w"] + params["out_b"]


# ------------------------------------ main ------------------------------------------

if __name__ == "__main__":
    num_nodes = 16
    input_dim = 8
    hidden_dim = 32
    output_dim = 8
    num_layers = 3

    key = jax.random.PRNGKey(0)
    key, k_x, k_p = jax.random.split(key, 3)

    # Node features [N, F_in]
    x = jax.random.normal(k_x, (num_nodes, input_dim), dtype=jnp.float32)

    # Simple bidirectional ring graph: edge_index [2, E]
    src = jnp.arange(num_nodes, dtype=jnp.int32)
    dst = jnp.roll(src, -1)
    edge_index = jnp.stack(
        [jnp.concatenate([src, dst]), jnp.concatenate([dst, src])], axis=0)
    edge_weight = None  # defaults to ones, as in GCNConv

    params = init_params(k_p, input_dim, hidden_dim, output_dim, num_layers)

    out = gnn_model_forward(params, x, edge_index, edge_weight)
    out = jax.block_until_ready(out)

    assert out.shape == (num_nodes, output_dim)
    assert jnp.all(jnp.isfinite(out))

    # bf16-tolerant correctness check against the pure-JAX f32 reference.
    ref = gnn_model_forward_ref(params, x, edge_index, edge_weight)
    assert jnp.allclose(out, ref, atol=1e-1, rtol=1e-1), (
        f"max abs err {jnp.max(jnp.abs(out - ref))}")

    print("KERNEL_OK")
</pallas_src>

<mosaic_0001>
module attributes {stable_mosaic.version = 11 : i64} {
  func.func @_resident_gnn_kernel(%arg0: i32, %arg1: memref<128x128xbf16, #tpu.memory_space<vmem>>, %arg2: memref<128x128xbf16, #tpu.memory_space<vmem>>, %arg3: memref<4x128x128xbf16, #tpu.memory_space<vmem>>, %arg4: memref<4x1x128xf32, #tpu.memory_space<vmem>>, %arg5: memref<128x128xf32, #tpu.memory_space<vmem>>) attributes {dimension_semantics = [#tpu.dimension_semantics<arbitrary>], iteration_bounds = array<i64: 1>, scalar_prefetch = 0 : i64, scratch_operands = 0 : i64, tpu.core_type = #tpu.core_type<tc>, window_params = [{pipeline_mode = #tpu.pipeline_mode<synchronous>, transform_indices = @transform_0, window_bounds = array<i64: 128, 128>}, {pipeline_mode = #tpu.pipeline_mode<synchronous>, transform_indices = @transform_1, window_bounds = array<i64: 128, 128>}, {pipeline_mode = #tpu.pipeline_mode<synchronous>, transform_indices = @transform_2, window_bounds = array<i64: 4, 128, 128>}, {pipeline_mode = #tpu.pipeline_mode<synchronous>, transform_indices = @transform_3, window_bounds = array<i64: 4, 1, 128>}, {pipeline_mode = #tpu.pipeline_mode<synchronous>, transform_indices = @transform_4, window_bounds = array<i64: 128, 128>}]} {
    %c0 = arith.constant 0 : index
    %c0_0 = arith.constant 0 : index
    %0 = vector.load %arg1[%c0, %c0_0] : memref<128x128xbf16, #tpu.memory_space<vmem>>, vector<128x128xbf16>
    %c0_1 = arith.constant 0 : index
    %c0_2 = arith.constant 0 : index
    %1 = vector.load %arg2[%c0_1, %c0_2] : memref<128x128xbf16, #tpu.memory_space<vmem>>, vector<128x128xbf16>
    %c0_3 = arith.constant 0 : index
    %c0_4 = arith.constant 0 : index
    %c0_5 = arith.constant 0 : index
    %2 = vector.load %arg3[%c0_3, %c0_4, %c0_5] : memref<4x128x128xbf16, #tpu.memory_space<vmem>>, vector<1x128x128xbf16>
    %3 = vector.shape_cast %2 : vector<1x128x128xbf16> to vector<128x128xbf16>
    %cst = arith.constant dense<0.000000e+00> : vector<128x128xf32>
    %4 = tpu.matmul %1, %3, %cst {dimension_numbers = #tpu.dot_dimension_numbers<[1], [0], [0], [1], [0, 0, 1, 1], [], []>} : vector<128x128xbf16>, vector<128x128xbf16>, vector<128x128xf32> -> vector<128x128xf32>
    %5 = arith.truncf %4 : vector<128x128xf32> to vector<128x128xbf16>
    %cst_6 = arith.constant dense<0.000000e+00> : vector<128x128xf32>
    %6 = tpu.matmul %0, %5, %cst_6 {dimension_numbers = #tpu.dot_dimension_numbers<[1], [0], [0], [1], [0, 0, 1, 1], [], []>} : vector<128x128xbf16>, vector<128x128xbf16>, vector<128x128xf32> -> vector<128x128xf32>
    %c0_7 = arith.constant 0 : index
    %c0_8 = arith.constant 0 : index
    %c0_9 = arith.constant 0 : index
    %7 = vector.load %arg4[%c0_7, %c0_8, %c0_9] : memref<4x1x128xf32, #tpu.memory_space<vmem>>, vector<1x1x128xf32>
    %8 = vector.shape_cast %7 : vector<1x1x128xf32> to vector<1x128xf32>
    %9 = vector.broadcast %8 : vector<1x128xf32> to vector<128x128xf32>
    %10 = arith.addf %6, %9 : vector<128x128xf32>
    %cst_10 = arith.constant 0.000000e+00 : f32
    %11 = vector.broadcast %cst_10 : f32 to vector<128x128xf32>
    %12 = arith.maximumf %10, %11 : vector<128x128xf32>
    %13 = arith.truncf %12 : vector<128x128xf32> to vector<128x128xbf16>
    %c1 = arith.constant 1 : index
    %c0_11 = arith.constant 0 : index
    %c0_12 = arith.constant 0 : index
    %14 = vector.load %arg3[%c1, %c0_11, %c0_12] : memref<4x128x128xbf16, #tpu.memory_space<vmem>>, vector<1x128x128xbf16>
    %15 = vector.shape_cast %14 : vector<1x128x128xbf16> to vector<128x128xbf16>
    %cst_13 = arith.constant dense<0.000000e+00> : vector<128x128xf32>
    %16 = tpu.matmul %13, %15, %cst_13 {dimension_numbers = #tpu.dot_dimension_numbers<[1], [0], [0], [1], [0, 0, 1, 1], [], []>} : vector<128x128xbf16>, vector<128x128xbf16>, vector<128x128xf32> -> vector<128x128xf32>
    %17 = arith.truncf %16 : vector<128x128xf32> to vector<128x128xbf16>
    %cst_14 = arith.constant dense<0.000000e+00> : vector<128x128xf32>
    %18 = tpu.matmul %0, %17, %cst_14 {dimension_numbers = #tpu.dot_dimension_numbers<[1], [0], [0], [1], [0, 0, 1, 1], [], []>} : vector<128x128xbf16>, vector<128x128xbf16>, vector<128x128xf32> -> vector<128x128xf32>
    %c1_15 = arith.constant 1 : index
    %c0_16 = arith.constant 0 : index
    %c0_17 = arith.constant 0 : index
    %19 = vector.load %arg4[%c1_15, %c0_16, %c0_17] : memref<4x1x128xf32, #tpu.memory_space<vmem>>, vector<1x1x128xf32>
    %20 = vector.shape_cast %19 : vector<1x1x128xf32> to vector<1x128xf32>
    %21 = vector.broadcast %20 : vector<1x128xf32> to vector<128x128xf32>
    %22 = arith.addf %18, %21 : vector<128x128xf32>
    %cst_18 = arith.constant 0.000000e+00 : f32
    %23 = vector.broadcast %cst_18 : f32 to vector<128x128xf32>
    %24 = arith.maximumf %22, %23 : vector<128x128xf32>
    %25 = arith.truncf %24 : vector<128x128xf32> to vector<128x128xbf16>
    %c2 = arith.constant 2 : index
    %c0_19 = arith.constant 0 : index
    %c0_20 = arith.constant 0 : index
    %26 = vector.load %arg3[%c2, %c0_19, %c0_20] : memref<4x128x128xbf16, #tpu.memory_space<vmem>>, vector<1x128x128xbf16>
    %27 = vector.shape_cast %26 : vector<1x128x128xbf16> to vector<128x128xbf16>
    %cst_21 = arith.constant dense<0.000000e+00> : vector<128x128xf32>
    %28 = tpu.matmul %25, %27, %cst_21 {dimension_numbers = #tpu.dot_dimension_numbers<[1], [0], [0], [1], [0, 0, 1, 1], [], []>} : vector<128x128xbf16>, vector<128x128xbf16>, vector<128x128xf32> -> vector<128x128xf32>
    %29 = arith.truncf %28 : vector<128x128xf32> to vector<128x128xbf16>
    %cst_22 = arith.constant dense<0.000000e+00> : vector<128x128xf32>
    %30 = tpu.matmul %0, %29, %cst_22 {dimension_numbers = #tpu.dot_dimension_numbers<[1], [0], [0], [1], [0, 0, 1, 1], [], []>} : vector<128x128xbf16>, vector<128x128xbf16>, vector<128x128xf32> -> vector<128x128xf32>
    %c2_23 = arith.constant 2 : index
    %c0_24 = arith.constant 0 : index
    %c0_25 = arith.constant 0 : index
    %31 = vector.load %arg4[%c2_23, %c0_24, %c0_25] : memref<4x1x128xf32, #tpu.memory_space<vmem>>, vector<1x1x128xf32>
    %32 = vector.shape_cast %31 : vector<1x1x128xf32> to vector<1x128xf32>
    %33 = vector.broadcast %32 : vector<1x128xf32> to vector<128x128xf32>
    %34 = arith.addf %30, %33 : vector<128x128xf32>
    %cst_26 = arith.constant 0.000000e+00 : f32
    %35 = vector.broadcast %cst_26 : f32 to vector<128x128xf32>
    %36 = arith.maximumf %34, %35 : vector<128x128xf32>
    %37 = arith.truncf %36 : vector<128x128xf32> to vector<128x128xbf16>
    %c3 = arith.constant 3 : index
    %c0_27 = arith.constant 0 : index
    %c0_28 = arith.constant 0 : index
    %38 = vector.load %arg3[%c3, %c0_27, %c0_28] : memref<4x128x128xbf16, #tpu.memory_space<vmem>>, vector<1x128x128xbf16>
    %39 = vector.shape_cast %38 : vector<1x128x128xbf16> to vector<128x128xbf16>
    %cst_29 = arith.constant dense<0.000000e+00> : vector<128x128xf32>
    %40 = tpu.matmul %37, %39, %cst_29 {dimension_numbers = #tpu.dot_dimension_numbers<[1], [0], [0], [1], [0, 0, 1, 1], [], []>} : vector<128x128xbf16>, vector<128x128xbf16>, vector<128x128xf32> -> vector<128x128xf32>
    %c3_30 = arith.constant 3 : index
    %c0_31 = arith.constant 0 : index
    %c0_32 = arith.constant 0 : index
    %41 = vector.load %arg4[%c3_30, %c0_31, %c0_32] : memref<4x1x128xf32, #tpu.memory_space<vmem>>, vector<1x1x128xf32>
    %42 = vector.shape_cast %41 : vector<1x1x128xf32> to vector<1x128xf32>
    %43 = vector.broadcast %42 : vector<1x128xf32> to vector<128x128xf32>
    %44 = arith.addf %40, %43 : vector<128x128xf32>
    %c0_33 = arith.constant 0 : index
    %c0_34 = arith.constant 0 : index
    %45 = vector.load %arg5[%c0_33, %c0_34] : memref<128x128xf32, #tpu.memory_space<vmem>>, vector<128x128xf32>
    tpu.vector_store %arg5[%c0_33, %c0_34], %44 {strides = array<i32>} : memref<128x128xf32, #tpu.memory_space<vmem>>, vector<128x128xf32>,
    return
  }
  func.func @transform_0(%arg0: i32) -> (i32, i32) {
    %c0_i32 = arith.constant 0 : i32
    %c0_i32_0 = arith.constant 0 : i32
    %c0_i32_1 = arith.constant 0 : i32
    return %c0_i32, %c0_i32_0 : i32, i32
  }
  func.func @transform_1(%arg0: i32) -> (i32, i32) {
    %c0_i32 = arith.constant 0 : i32
    %c0_i32_0 = arith.constant 0 : i32
    %c0_i32_1 = arith.constant 0 : i32
    return %c0_i32, %c0_i32_0 : i32, i32
  }
  func.func @transform_2(%arg0: i32) -> (i32, i32, i32) {
    %c0_i32 = arith.constant 0 : i32
    %c0_i32_0 = arith.constant 0 : i32
    %c0_i32_1 = arith.constant 0 : i32
    %c0_i32_2 = arith.constant 0 : i32
    return %c0_i32, %c0_i32_0, %c0_i32_1 : i32, i32, i32
  }
  func.func @transform_3(%arg0: i32) -> (i32, i32, i32) {
    %c0_i32 = arith.constant 0 : i32
    %c0_i32_0 = arith.constant 0 : i32
    %c0_i32_1 = arith.constant 0 : i32
    %c0_i32_2 = arith.constant 0 : i32
    return %c0_i32, %c0_i32_0, %c0_i32_1 : i32, i32, i32
  }
  func.func @transform_4(%arg0: i32) -> (i32, i32) {
    %c0_i32 = arith.constant 0 : i32
    %c0_i32_0 = arith.constant 0 : i32
    %c0_i32_1 = arith.constant 0 : i32
    return %c0_i32, %c0_i32_0 : i32, i32
  }
}

</mosaic_0001>

<llo_original>
// kernel: tpu_custom_call.1
$region0: #{tpu_custom_call.1}
  #allocation0 [shape = 'u32[]', space=smem, size = 0x4, offset = 0x4, fixed_abs, tag = 'smem constant byte address 0x4 - core index']
  #allocation1 [shape = 'u32[72,128]{1,0:T(1,128)}', space=vmem, size = 0x9000, scoped, tag = 'internal scratch']
  %s0 = inlined_call_operand.hbm [shape: bf16[128,128], index: 0, kind: input, shape index: {}]
  %s1 = inlined_call_operand.hbm [shape: bf16[128,128], index: 1, kind: input, shape index: {}]
  %s2 = inlined_call_operand.hbm [shape: bf16[4,128,128], index: 2, kind: input, shape index: {}]
  %s3 = inlined_call_operand.hbm [shape: f32[4,1,128], index: 3, kind: input, shape index: {}]
  %s4 = inlined_call_operand.hbm [shape: f32[128,128], index: 4, kind: output, shape index: {}]
  %s5 = sld [smem:[#allocation0]]
  $region42: #{tpu_custom_call.1} parent=0
    _
  %s7 = ssub.s32 1, %s5
  %s8 = scalar_select 0, %s7, %s5
  $region1: #{tpu_custom_call.1} parent=0
    #allocation2 [shape = 'u8[32768]{0}', space=vmem, size = 0x8000, scoped, tag = 'input window, operand 0, single buffered']
    #allocation3 [shape = 's32[1]{0}', space=sflag, size = 0x4, scoped, tag = 'scoped memory for tpu_custom_call.1']
    #allocation4 [shape = 's32[1]{0}', space=sflag, size = 0x4, scoped, tag = 'scoped memory for tpu_custom_call.1']
    #allocation5 [shape = 'u8[32768]{0}', space=vmem, size = 0x8000, scoped, tag = 'input window, operand 1, single buffered']
    #allocation6 [shape = 's32[1]{0}', space=sflag, size = 0x4, scoped, tag = 'scoped memory for tpu_custom_call.1']
    #allocation7 [shape = 'u8[131072]{0}', space=vmem, size = 0x20000, scoped, tag = 'input window, operand 2, single buffered']
    #allocation8 [shape = 'u8[2048]{0}', space=vmem, size = 0x800, scoped, tag = 'input window, operand 3, single buffered']
    #allocation9 [shape = 's32[1]{0}', space=sflag, size = 0x4, scoped, tag = 'scoped memory for tpu_custom_call.1']
    #allocation10 [shape = 'u8[65536]{0}', space=vmem, size = 0x10000, scoped, tag = 'output window, operand 0, single buffered']
    %9 = vsyncpa [#allocation3], 0
    %10 = vsyncpa [#allocation6], 0
    %11 = vsyncpa [#allocation9], 0
    %12 = vsyncpa [#allocation4], 0
    // Predicated region
    $region2: #{tpu_custom_call.1} parent=1 // pred_check
      _
    $region3: #{tpu_custom_call.1} parent=1 // pred_check_branch
      %14 = sbr.rel (0) target = $region5
    $region4: #{tpu_custom_call.1} parent=1 // pred_region
      %16 = vsyncadd [#allocation3], 0
      %s17 = sshll.u32 %s0, 4
      %s18 = int_to_ptr.hbm [resolvable:$true] %s17
      %s19 = sshll.u32 [#allocation2], 4
      %s20 = int_to_ptr.vmem [resolvable:$true] %s19
      %25 = dma.hbm_to_vmem [thread:$0]  %s18, 1024, %s20, [#allocation3], 64, 64, 4
    $region5: #{tpu_custom_call.1} parent=1 // pred_fallthru
      _
    // Predicated region
    $region6: #{tpu_custom_call.1} parent=1 // pred_check
      _
    $region7: #{tpu_custom_call.1} parent=1 // pred_check_branch
      %27 = sbr.rel (0) target = $region9
    $region8: #{tpu_custom_call.1} parent=1 // pred_region
      %29 = vsyncadd [#allocation6], 0
      %s30 = sshll.u32 %s1, 4
      %s31 = int_to_ptr.hbm [resolvable:$true] %s30
      %s32 = sshll.u32 [#allocation5], 4
      %s33 = int_to_ptr.vmem [resolvable:$true] %s32
      %38 = dma.hbm_to_vmem [thread:$0]  %s31, 1024, %s33, [#allocation6], 64, 64, 4
    $region9: #{tpu_custom_call.1} parent=1 // pred_fallthru
      _
    // Predicated region
    $region10: #{tpu_custom_call.1} parent=1 // pred_check
      _
    $region11: #{tpu_custom_call.1} parent=1 // pred_check_branch
      %40 = sbr.rel (0) target = $region13
    $region12: #{tpu_custom_call.1} parent=1 // pred_region
      %42 = vsyncadd [#allocation6], 0
      %s43 = sshll.u32 %s2, 4
      %s44 = int_to_ptr.hbm [resolvable:$true] %s43
      %s45 = sshll.u32 [#allocation7], 4
      %s46 = int_to_ptr.vmem [resolvable:$true] %s45
      %51 = dma.hbm_to_vmem [thread:$0]  %s44, 4096, %s46, [#allocation6], 64, 64, 4
    $region13: #{tpu_custom_call.1} parent=1 // pred_fallthru
      _
    // Predicated region
    $region14: #{tpu_custom_call.1} parent=1 // pred_check
      _
    $region15: #{tpu_custom_call.1} parent=1 // pred_check_branch
      %53 = sbr.rel (0) target = $region17
    $region16: #{tpu_custom_call.1} parent=1 // pred_region
      %55 = vsyncadd [#allocation9], 0
      %s56 = sshll.u32 %s3, 4
      %s57 = int_to_ptr.hbm [resolvable:$true] %s56
      %s58 = sshll.u32 [#allocation8], 4
      %s59 = int_to_ptr.vmem [resolvable:$true] %s58
      %64 = dma.hbm_to_vmem [thread:$0]  %s57, 64, %s59, [#allocation9], 16, 16, 1
    $region17: #{tpu_custom_call.1} parent=1 // pred_fallthru
      _
    // Predicated region
    $region18: #{tpu_custom_call.1} parent=1 // pred_check
      _
    $region19: #{tpu_custom_call.1} parent=1 // pred_check_branch
      %66 = sbr.rel (0) target = $region21
    $region20: #{tpu_custom_call.1} parent=1 // pred_region
      %68 = dma.done [#allocation3], 1024
    $region21: #{tpu_custom_call.1} parent=1 // pred_fallthru
      _
    // Predicated region
    $region22: #{tpu_custom_call.1} parent=1 // pred_check
      _
    $region23: #{tpu_custom_call.1} parent=1 // pred_check_branch
      %70 = sbr.rel (0) target = $region25
    $region24: #{tpu_custom_call.1} parent=1 // pred_region
      %72 = dma.done [#allocation6], 1024
    $region25: #{tpu_custom_call.1} parent=1 // pred_fallthru
      _
    // Predicated region
    $region26: #{tpu_custom_call.1} parent=1 // pred_check
      _
    $region27: #{tpu_custom_call.1} parent=1 // pred_check_branch
      %74 = sbr.rel (0) target = $region29
    $region28: #{tpu_custom_call.1} parent=1 // pred_region
      %76 = dma.done [#allocation6], 4096
    $region29: #{tpu_custom_call.1} parent=1 // pred_fallthru
      _
    // Predicated region
    $region30: #{tpu_custom_call.1} parent=1 // pred_check
      _
    $region31: #{tpu_custom_call.1} parent=1 // pred_check_branch
      %78 = sbr.rel (0) target = $region33
    $region32: #{tpu_custom_call.1} parent=1 // pred_region
      %80 = dma.done [#allocation9], 64
    $region33: #{tpu_custom_call.1} parent=1 // pred_fallthru
      _
    %v81 = vld [vmem:[#allocation2] sm:$0xf]
    %v82 = vld [vmem:[#allocation2 + $0x4] sm:$0xf]
    %v83 = vld [vmem:[#allocation2 + $0x8] sm:$0xf]
    %v84 = vld [vmem:[#allocation2 + $0xc] sm:$0xf]
    %v85 = vld [vmem:[#allocation2 + $0x10] sm:$0xf]
    %v86 = vld [vmem:[#allocation2 + $0x14] sm:$0xf]
    %v87 = vld [vmem:[#allocation2 + $0x18] sm:$0xf]
    %v88 = vld [vmem:[#allocation2 + $0x1c] sm:$0xf]
    %v89 = vld [vmem:[#allocation2 + $0x20] sm:$0xf]
    %v90 = vld [vmem:[#allocation2 + $0x24] sm:$0xf]
    %v91 = vld [vmem:[#allocation2 + $0x28] sm:$0xf]
    %v92 = vld [vmem:[#allocation2 + $0x2c] sm:$0xf]
    %v93 = vld [vmem:[#allocation2 + $0x30] sm:$0xf]
    %v94 = vld [vmem:[#allocation2 + $0x34] sm:$0xf]
    %v95 = vld [vmem:[#allocation2 + $0x38] sm:$0xf]
    %v96 = vld [vmem:[#allocation2 + $0x3c] sm:$0xf]
    %v97 = vld [vmem:[#allocation5] sm:$0xf]
    %v98 = vld [vmem:[#allocation5 + $0x4] sm:$0xf]
    %v99 = vld [vmem:[#allocation5 + $0x8] sm:$0xf]
    %v100 = vld [vmem:[#allocation5 + $0xc] sm:$0xf]
    %v101 = vld [vmem:[#allocation5 + $0x10] sm:$0xf]
    %v102 = vld [vmem:[#allocation5 + $0x14] sm:$0xf]
    %v103 = vld [vmem:[#allocation5 + $0x18] sm:$0xf]
    %v104 = vld [vmem:[#allocation5 + $0x1c] sm:$0xf]
    %v105 = vld [vmem:[#allocation5 + $0x20] sm:$0xf]
    %v106 = vld [vmem:[#allocation5 + $0x24] sm:$0xf]
    %v107 = vld [vmem:[#allocation5 + $0x28] sm:$0xf]
    %v108 = vld [vmem:[#allocation5 + $0x2c] sm:$0xf]
    %v109 = vld [vmem:[#allocation5 + $0x30] sm:$0xf]
    %v110 = vld [vmem:[#allocation5 + $0x34] sm:$0xf]
    %v111 = vld [vmem:[#allocation5 + $0x38] sm:$0xf]
    %v112 = vld [vmem:[#allocation5 + $0x3c] sm:$0xf]
    %v113 = vld [vmem:[#allocation7] sm:$0xf]
    %v114 = vld [vmem:[#allocation7 + $0x4] sm:$0xf]
    %v115 = vld [vmem:[#allocation7 + $0x8] sm:$0xf]
    %v116 = vld [vmem:[#allocation7 + $0xc] sm:$0xf]
    %v117 = vld [vmem:[#allocation7 + $0x10] sm:$0xf]
    %v118 = vld [vmem:[#allocation7 + $0x14] sm:$0xf]
    %v119 = vld [vmem:[#allocation7 + $0x18] sm:$0xf]
    %v120 = vld [vmem:[#allocation7 + $0x1c] sm:$0xf]
    %v121 = vld [vmem:[#allocation7 + $0x20] sm:$0xf]
    %v122 = vld [vmem:[#allocation7 + $0x24] sm:$0xf]
    %v123 = vld [vmem:[#allocation7 + $0x28] sm:$0xf]
    %v124 = vld [vmem:[#allocation7 + $0x2c] sm:$0xf]
    %v125 = vld [vmem:[#allocation7 + $0x30] sm:$0xf]
    %v126 = vld [vmem:[#allocation7 + $0x34] sm:$0xf]
    %v127 = vld [vmem:[#allocation7 + $0x38] sm:$0xf]
    %v128 = vld [vmem:[#allocation7 + $0x3c] sm:$0xf]
    %v145 = vunpack.c.l.b16 %v97
    %v146 = vunpack.c.l.b16 %v98
    %v147 = vunpack.c.l.b16 %v99
    %v148 = vunpack.c.l.b16 %v100
    %v149 = vunpack.c.l.b16 %v101
    %v150 = vunpack.c.l.b16 %v102
    %v151 = vunpack.c.l.b16 %v103
    %v152 = vunpack.c.l.b16 %v104
    %v153 = vunpack.c.l.b16 %v105
    %v154 = vunpack.c.l.b16 %v106
    %v155 = vunpack.c.l.b16 %v107
    %v156 = vunpack.c.l.b16 %v108
    %v157 = vunpack.c.l.b16 %v109
    %v158 = vunpack.c.l.b16 %v110
    %v159 = vunpack.c.l.b16 %v111
    %v160 = vunpack.c.l.b16 %v112
    %v161 = vpack.c.b16 %v146, %v145
    %v162 = vpack.c.b16 %v148, %v147
    %v163 = vpack.c.b16 %v150, %v149
    %v164 = vpack.c.b16 %v152, %v151
    %v165 = vpack.c.b16 %v154, %v153
    %v166 = vpack.c.b16 %v156, %v155
    %v167 = vpack.c.b16 %v158, %v157
    %v168 = vpack.c.b16 %v160, %v159
    %v193 = vunpack.c.l.b16 %v113
    %v194 = vunpack.c.l.b16 %v114
    %v195 = vunpack.c.l.b16 %v115
    %v196 = vunpack.c.l.b16 %v116
    %v197 = vunpack.c.l.b16 %v117
    %v198 = vunpack.c.l.b16 %v118
    %v199 = vunpack.c.l.b16 %v119
    %v200 = vunpack.c.l.b16 %v120
    %v201 = vunpack.c.l.b16 %v121
    %v202 = vunpack.c.l.b16 %v122
    %v203 = vunpack.c.l.b16 %v123
    %v204 = vunpack.c.l.b16 %v124
    %v205 = vunpack.c.l.b16 %v125
    %v206 = vunpack.c.l.b16 %v126
    %v207 = vunpack.c.l.b16 %v127
    %v208 = vunpack.c.l.b16 %v128
    %v209 = vpack.c.b16 %v194, %v193
    %v210 = vpack.c.b16 %v196, %v195
    %v211 = vpack.c.b16 %v198, %v197
    %v212 = vpack.c.b16 %v200, %v199
    %v213 = vpack.c.b16 %v202, %v201
    %v214 = vpack.c.b16 %v204, %v203
    %v215 = vpack.c.b16 %v206, %v205
    %v216 = vpack.c.b16 %v208, %v207
    %225 = vmatpush.bf16.msra.mxu0 %v216
    %226 = vmatpush.bf16.msra.mxu0 %v215
    %227 = vmatpush.bf16.msra.mxu0 %v214
    %228 = vmatpush.bf16.msra.mxu0 %v213
    %229 = vmatpush.bf16.msra.mxu0 %v212
    %230 = vmatpush.bf16.msra.mxu0 %v211
    %231 = vmatpush.bf16.msra.mxu0 %v210
    %232 = vmatpush.bf16.msra.mxu0 %v209
    %233 = vmatmul.bf16.gmra.mxu0 %v161
    %v234 = vpop.f32.mrf.mxu0
    %v235 = vadd.f32 0.0, %v234
    %v236 = vpop.f32.mrf.mxu0
    %v237 = vadd.f32 0.0, %v236
    %238 = vmatmul.bf16.gmra.mxu0 %v162
    %v239 = vpop.f32.mrf.mxu0
    %v240 = vadd.f32 0.0, %v239
    %v241 = vpop.f32.mrf.mxu0
    %v242 = vadd.f32 0.0, %v241
    %243 = vmatmul.bf16.gmra.mxu0 %v163
    %v244 = vpop.f32.mrf.mxu0
    %v245 = vadd.f32 0.0, %v244
    %v246 = vpop.f32.mrf.mxu0
    %v247 = vadd.f32 0.0, %v246
    %248 = vmatmul.bf16.gmra.mxu0 %v164
    %v249 = vpop.f32.mrf.mxu0
    %v250 = vadd.f32 0.0, %v249
    %v251 = vpop.f32.mrf.mxu0
    %v252 = vadd.f32 0.0, %v251
    %253 = vmatmul.bf16.gmra.mxu0 %v165
    %v254 = vpop.f32.mrf.mxu0
    %v255 = vadd.f32 0.0, %v254
    %v256 = vpop.f32.mrf.mxu0
    %v257 = vadd.f32 0.0, %v256
    %258 = vmatmul.bf16.gmra.mxu0 %v166
    %v259 = vpop.f32.mrf.mxu0
    %v260 = vadd.f32 0.0, %v259
    %v261 = vpop.f32.mrf.mxu0
    %v262 = vadd.f32 0.0, %v261
    %263 = vmatmul.bf16.gmra.mxu0 %v167
    %v264 = vpop.f32.mrf.mxu0
    %v265 = vadd.f32 0.0, %v264
    %v266 = vpop.f32.mrf.mxu0
    %v267 = vadd.f32 0.0, %v266
    %268 = vmatmul.bf16.gmra.mxu0 %v168
    %v269 = vpop.f32.mrf.mxu0
    %v270 = vadd.f32 0.0, %v269
    %v271 = vpop.f32.mrf.mxu0
    %v272 = vadd.f32 0.0, %v271
    %273 = vdwg.mxu0
    %v274 = vpack.c.bf16 %v237, %v235
    %v275 = vpack.c.bf16 %v242, %v240
    %v276 = vpack.c.bf16 %v247, %v245
    %v277 = vpack.c.bf16 %v252, %v250
    %v278 = vpack.c.bf16 %v257, %v255
    %v279 = vpack.c.bf16 %v262, %v260
    %v280 = vpack.c.bf16 %v267, %v265
    %v281 = vpack.c.bf16 %v272, %v270
    %v282 = vld [vmem:[#allocation8] sm:$0x1]
    %v284 = vperm.slane %v282, 0
    %v302 = vunpack.c.l.b16 %v81
    %v303 = vunpack.c.l.b16 %v82
    %v304 = vunpack.c.l.b16 %v83
    %v305 = vunpack.c.l.b16 %v84
    %v306 = vunpack.c.l.b16 %v85
    %v307 = vunpack.c.l.b16 %v86
    %v308 = vunpack.c.l.b16 %v87
    %v309 = vunpack.c.l.b16 %v88
    %v310 = vunpack.c.l.b16 %v89
    %v311 = vunpack.c.l.b16 %v90
    %v312 = vunpack.c.l.b16 %v91
    %v313 = vunpack.c.l.b16 %v92
    %v314 = vunpack.c.l.b16 %v93
    %v315 = vunpack.c.l.b16 %v94
    %v316 = vunpack.c.l.b16 %v95
    %v317 = vunpack.c.l.b16 %v96
    %v318 = vpack.c.b16 %v303, %v302
    %v319 = vpack.c.b16 %v305, %v304
    %v320 = vpack.c.b16 %v307, %v306
    %v321 = vpack.c.b16 %v309, %v308
    %v322 = vpack.c.b16 %v311, %v310
    %v323 = vpack.c.b16 %v313, %v312
    %v324 = vpack.c.b16 %v315, %v314
    %v325 = vpack.c.b16 %v317, %v316
    %334 = vmatpush.bf16.msra.mxu0 %v281
    %335 = vmatpush.bf16.msra.mxu0 %v280
    %336 = vmatpush.bf16.msra.mxu0 %v279
    %337 = vmatpush.bf16.msra.mxu0 %v278
    %338 = vmatpush.bf16.msra.mxu0 %v277
    %339 = vmatpush.bf16.msra.mxu0 %v276
    %340 = vmatpush.bf16.msra.mxu0 %v275
    %341 = vmatpush.bf16.msra.mxu0 %v274
    %342 = vmatmul.bf16.gmra.mxu0 %v318
    %v343 = vpop.f32.mrf.mxu0
    %v344 = vadd.f32 %v284, %v343
    %v345 = vpop.f32.mrf.mxu0
    %v346 = vadd.f32 %v284, %v345
    %347 = vmatmul.bf16.gmra.mxu0 %v319
    %v348 = vpop.f32.mrf.mxu0
    %v349 = vadd.f32 %v284, %v348
    %v350 = vpop.f32.mrf.mxu0
    %v351 = vadd.f32 %v284, %v350
    %352 = vmatmul.bf16.gmra.mxu0 %v320
    %v353 = vpop.f32.mrf.mxu0
    %v354 = vadd.f32 %v284, %v353
    %v355 = vpop.f32.mrf.mxu0
    %v356 = vadd.f32 %v284, %v355
    %357 = vmatmul.bf16.gmra.mxu0 %v321
    %v358 = vpop.f32.mrf.mxu0
    %v359 = vadd.f32 %v284, %v358
    %v360 = vpop.f32.mrf.mxu0
    %v361 = vadd.f32 %v284, %v360
    %362 = vmatmul.bf16.gmra.mxu0 %v322
    %v363 = vpop.f32.mrf.mxu0
    %v364 = vadd.f32 %v284, %v363
    %v365 = vpop.f32.mrf.mxu0
    %v366 = vadd.f32 %v284, %v365
    %367 = vmatmul.bf16.gmra.mxu0 %v323
    %v368 = vpop.f32.mrf.mxu0
    %v369 = vadd.f32 %v284, %v368
    %v370 = vpop.f32.mrf.mxu0
    %v371 = vadd.f32 %v284, %v370
    %372 = vmatmul.bf16.gmra.mxu0 %v324
    %v373 = vpop.f32.mrf.mxu0
    %v374 = vadd.f32 %v284, %v373
    %v375 = vpop.f32.mrf.mxu0
    %v376 = vadd.f32 %v284, %v375
    %377 = vmatmul.bf16.gmra.mxu0 %v325
    %v378 = vpop.f32.mrf.mxu0
    %v379 = vadd.f32 %v284, %v378
    %v380 = vpop.f32.mrf.mxu0
    %v381 = vadd.f32 %v284, %v380
    %382 = vdwg.mxu0
    %v383 = vmax.f32 %v344, 0.0
    %v384 = vmax.f32 %v346, 0.0
    %v385 = vmax.f32 %v349, 0.0
    %v386 = vmax.f32 %v351, 0.0
    %v387 = vmax.f32 %v354, 0.0
    %v388 = vmax.f32 %v356, 0.0
    %v389 = vmax.f32 %v359, 0.0
    %v390 = vmax.f32 %v361, 0.0
    %v391 = vmax.f32 %v364, 0.0
    %v392 = vmax.f32 %v366, 0.0
    %v393 = vmax.f32 %v369, 0.0
    %v394 = vmax.f32 %v371, 0.0
    %v395 = vmax.f32 %v374, 0.0
    %v396 = vmax.f32 %v376, 0.0
    %v397 = vmax.f32 %v379, 0.0
    %v398 = vmax.f32 %v381, 0.0
    %v399 = vpack.c.bf16 %v384, %v383
    %v400 = vpack.c.bf16 %v386, %v385
    %v401 = vpack.c.bf16 %v388, %v387
    %v402 = vpack.c.bf16 %v390, %v389
    %v403 = vpack.c.bf16 %v392, %v391
    %v404 = vpack.c.bf16 %v394, %v393
    %v405 = vpack.c.bf16 %v396, %v395
    %v406 = vpack.c.bf16 %v398, %v397
    %s407 = scalar_lea.vmem [#allocation7], 64
    %v408 = vld [vmem:[%s407] sm:$0xf]
    %v409 = vld [vmem:[%s407 + $0x4] sm:$0xf]
    %v410 = vld [vmem:[%s407 + $0x8] sm:$0xf]
    %v411 = vld [vmem:[%s407 + $0xc] sm:$0xf]
    %v412 = vld [vmem:[%s407 + $0x10] sm:$0xf]
    %v413 = vld [vmem:[%s407 + $0x14] sm:$0xf]
    %v414 = vld [vmem:[%s407 + $0x18] sm:$0xf]
    %v415 = vld [vmem:[%s407 + $0x1c] sm:$0xf]
    %v416 = vld [vmem:[%s407 + $0x20] sm:$0xf]
    %v417 = vld [vmem:[%s407 + $0x24] sm:$0xf]
    %v418 = vld [vmem:[%s407 + $0x28] sm:$0xf]
    %v419 = vld [vmem:[%s407 + $0x2c] sm:$0xf]
    %v420 = vld [vmem:[%s407 + $0x30] sm:$0xf]
    %v421 = vld [vmem:[%s407 + $0x34] sm:$0xf]
    %v422 = vld [vmem:[%s407 + $0x38] sm:$0xf]
    %v423 = vld [vmem:[%s407 + $0x3c] sm:$0xf]
    %v440 = vunpack.c.l.b16 %v408
    %v441 = vunpack.c.l.b16 %v409
    %v442 = vunpack.c.l.b16 %v410
    %v443 = vunpack.c.l.b16 %v411
    %v444 = vunpack.c.l.b16 %v412
    %v445 = vunpack.c.l.b16 %v413
    %v446 = vunpack.c.l.b16 %v414
    %v447 = vunpack.c.l.b16 %v415
    %v448 = vunpack.c.l.b16 %v416
    %v449 = vunpack.c.l.b16 %v417
    %v450 = vunpack.c.l.b16 %v418
    %v451 = vunpack.c.l.b16 %v419
    %v452 = vunpack.c.l.b16 %v420
    %v453 = vunpack.c.l.b16 %v421
    %v454 = vunpack.c.l.b16 %v422
    %v455 = vunpack.c.l.b16 %v423
    %v456 = vpack.c.b16 %v441, %v440
    %v457 = vpack.c.b16 %v443, %v442
    %v458 = vpack.c.b16 %v445, %v444
    %v459 = vpack.c.b16 %v447, %v446
    %v460 = vpack.c.b16 %v449, %v448
    %v461 = vpack.c.b16 %v451, %v450
    %v462 = vpack.c.b16 %v453, %v452
    %v463 = vpack.c.b16 %v455, %v454
    %472 = vmatpush.bf16.msra.mxu0 %v463
    %473 = vmatpush.bf16.msra.mxu0 %v462
    %474 = vmatpush.bf16.msra.mxu0 %v461
    %475 = vmatpush.bf16.msra.mxu0 %v460
    %476 = vmatpush.bf16.msra.mxu0 %v459
    %477 = vmatpush.bf16.msra.mxu0 %v458
    %478 = vmatpush.bf16.msra.mxu0 %v457
    %479 = vmatpush.bf16.msra.mxu0 %v456
    %480 = vmatmul.bf16.gmra.mxu0 %v399
    %v481 = vpop.f32.mrf.mxu0
    %v482 = vadd.f32 0.0, %v481
    %v483 = vpop.f32.mrf.mxu0
    %v484 = vadd.f32 0.0, %v483
    %485 = vmatmul.bf16.gmra.mxu0 %v400
    %v486 = vpop.f32.mrf.mxu0
    %v487 = vadd.f32 0.0, %v486
    %v488 = vpop.f32.mrf.mxu0
    %v489 = vadd.f32 0.0, %v488
    %490 = vmatmul.bf16.gmra.mxu0 %v401
    %v491 = vpop.f32.mrf.mxu0
    %v492 = vadd.f32 0.0, %v491
    %v493 = vpop.f32.mrf.mxu0
    %v494 = vadd.f32 0.0, %v493
    %495 = vmatmul.bf16.gmra.mxu0 %v402
    %v496 = vpop.f32.mrf.mxu0
    %v497 = vadd.f32 0.0, %v496
    %v498 = vpop.f32.mrf.mxu0
    %v499 = vadd.f32 0.0, %v498
    %500 = vmatmul.bf16.gmra.mxu0 %v403
    %v501 = vpop.f32.mrf.mxu0
    %v502 = vadd.f32 0.0, %v501
    %v503 = vpop.f32.mrf.mxu0
    %v504 = vadd.f32 0.0, %v503
    %505 = vmatmul.bf16.gmra.mxu0 %v404
    %v506 = vpop.f32.mrf.mxu0
    %v507 = vadd.f32 0.0, %v506
    %v508 = vpop.f32.mrf.mxu0
    %v509 = vadd.f32 0.0, %v508
    %510 = vmatmul.bf16.gmra.mxu0 %v405
    %v511 = vpop.f32.mrf.mxu0
    %v512 = vadd.f32 0.0, %v511
    %v513 = vpop.f32.mrf.mxu0
    %v514 = vadd.f32 0.0, %v513
    %515 = vmatmul.bf16.gmra.mxu0 %v406
    %v516 = vpop.f32.mrf.mxu0
    %v517 = vadd.f32 0.0, %v516
    %v518 = vpop.f32.mrf.mxu0
    %v519 = vadd.f32 0.0, %v518
    %520 = vdwg.mxu0
    %v521 = vpack.c.bf16 %v484, %v482
    %v522 = vpack.c.bf16 %v489, %v487
    %v523 = vpack.c.bf16 %v494, %v492
    %v524 = vpack.c.bf16 %v499, %v497
    %v525 = vpack.c.bf16 %v504, %v502
    %v526 = vpack.c.bf16 %v509, %v507
    %v527 = vpack.c.bf16 %v514, %v512
    %v528 = vpack.c.bf16 %v519, %v517
    %s529 = scalar_lea.vmem [#allocation8], 1
    %v530 = vld [vmem:[%s529] sm:$0x1]
    %v532 = vperm.slane %v530, 0
    %534 = vmatpush.bf16.msra.mxu0 %v528
    %535 = vmatpush.bf16.msra.mxu0 %v527
    %536 = vmatpush.bf16.msra.mxu0 %v526
    %537 = vmatpush.bf16.msra.mxu0 %v525
    %538 = vmatpush.bf16.msra.mxu0 %v524
    %539 = vmatpush.bf16.msra.mxu0 %v523
    %540 = vmatpush.bf16.msra.mxu0 %v522
    %541 = vmatpush.bf16.msra.mxu0 %v521
    %542 = vmatmul.bf16.gmra.mxu0 %v318
    %v543 = vpop.f32.mrf.mxu0
    %v544 = vadd.f32 %v532, %v543
    %v545 = vpop.f32.mrf.mxu0
    %v546 = vadd.f32 %v532, %v545
    %547 = vmatmul.bf16.gmra.mxu0 %v319
    %v548 = vpop.f32.mrf.mxu0
    %v549 = vadd.f32 %v532, %v548
    %v550 = vpop.f32.mrf.mxu0
    %v551 = vadd.f32 %v532, %v550
    %552 = vmatmul.bf16.gmra.mxu0 %v320
    %v553 = vpop.f32.mrf.mxu0
    %v554 = vadd.f32 %v532, %v553
    %v555 = vpop.f32.mrf.mxu0
    %v556 = vadd.f32 %v532, %v555
    %557 = vmatmul.bf16.gmra.mxu0 %v321
    %v558 = vpop.f32.mrf.mxu0
    %v559 = vadd.f32 %v532, %v558
    %v560 = vpop.f32.mrf.mxu0
    %v561 = vadd.f32 %v532, %v560
    %562 = vmatmul.bf16.gmra.mxu0 %v322
    %v563 = vpop.f32.mrf.mxu0
    %v564 = vadd.f32 %v532, %v563
    %v565 = vpop.f32.mrf.mxu0
    %v566 = vadd.f32 %v532, %v565
    %567 = vmatmul.bf16.gmra.mxu0 %v323
    %v568 = vpop.f32.mrf.mxu0
    %v569 = vadd.f32 %v532, %v568
    %v570 = vpop.f32.mrf.mxu0
    %v571 = vadd.f32 %v532, %v570
    %572 = vmatmul.bf16.gmra.mxu0 %v324
    %v573 = vpop.f32.mrf.mxu0
    %v574 = vadd.f32 %v532, %v573
    %v575 = vpop.f32.mrf.mxu0
    %v576 = vadd.f32 %v532, %v575
    %577 = vmatmul.bf16.gmra.mxu0 %v325
    %v578 = vpop.f32.mrf.mxu0
    %v579 = vadd.f32 %v532, %v578
    %v580 = vpop.f32.mrf.mxu0
    %v581 = vadd.f32 %v532, %v580
    %582 = vdwg.mxu0
    %v583 = vmax.f32 %v544, 0.0
    %v584 = vmax.f32 %v546, 0.0
    %v585 = vmax.f32 %v549, 0.0
    %v586 = vmax.f32 %v551, 0.0
    %v587 = vmax.f32 %v554, 0.0
    %v588 = vmax.f32 %v556, 0.0
    %v589 = vmax.f32 %v559, 0.0
    %v590 = vmax.f32 %v561, 0.0
    %v591 = vmax.f32 %v564, 0.0
    %v592 = vmax.f32 %v566, 0.0
    %v593 = vmax.f32 %v569, 0.0
    %v594 = vmax.f32 %v571, 0.0
    %v595 = vmax.f32 %v574, 0.0
    %v596 = vmax.f32 %v576, 0.0
    %v597 = vmax.f32 %v579, 0.0
    %v598 = vmax.f32 %v581, 0.0
    %v599 = vpack.c.bf16 %v584, %v583
    %v600 = vpack.c.bf16 %v586, %v585
    %v601 = vpack.c.bf16 %v588, %v587
    %v602 = vpack.c.bf16 %v590, %v589
    %v603 = vpack.c.bf16 %v592, %v591
    %v604 = vpack.c.bf16 %v594, %v593
    %v605 = vpack.c.bf16 %v596, %v595
    %v606 = vpack.c.bf16 %v598, %v597
    %s607 = scalar_lea.vmem [#allocation7], 128
    %v608 = vld [vmem:[%s607] sm:$0xf]
    %v609 = vld [vmem:[%s607 + $0x4] sm:$0xf]
    %v610 = vld [vmem:[%s607 + $0x8] sm:$0xf]
    %v611 = vld [vmem:[%s607 + $0xc] sm:$0xf]
    %v612 = vld [vmem:[%s607 + $0x10] sm:$0xf]
    %v613 = vld [vmem:[%s607 + $0x14] sm:$0xf]
    %v614 = vld [vmem:[%s607 + $0x18] sm:$0xf]
    %v615 = vld [vmem:[%s607 + $0x1c] sm:$0xf]
    %v616 = vld [vmem:[%s607 + $0x20] sm:$0xf]
    %v617 = vld [vmem:[%s607 + $0x24] sm:$0xf]
    %v618 = vld [vmem:[%s607 + $0x28] sm:$0xf]
    %v619 = vld [vmem:[%s607 + $0x2c] sm:$0xf]
    %v620 = vld [vmem:[%s607 + $0x30] sm:$0xf]
    %v621 = vld [vmem:[%s607 + $0x34] sm:$0xf]
    %v622 = vld [vmem:[%s607 + $0x38] sm:$0xf]
    %v623 = vld [vmem:[%s607 + $0x3c] sm:$0xf]
    %v640 = vunpack.c.l.b16 %v608
    %v641 = vunpack.c.l.b16 %v609
    %v642 = vunpack.c.l.b16 %v610
    %v643 = vunpack.c.l.b16 %v611
    %v644 = vunpack.c.l.b16 %v612
    %v645 = vunpack.c.l.b16 %v613
    %v646 = vunpack.c.l.b16 %v614
    %v647 = vunpack.c.l.b16 %v615
    %v648 = vunpack.c.l.b16 %v616
    %v649 = vunpack.c.l.b16 %v617
    %v650 = vunpack.c.l.b16 %v618
    %v651 = vunpack.c.l.b16 %v619
    %v652 = vunpack.c.l.b16 %v620
    %v653 = vunpack.c.l.b16 %v621
    %v654 = vunpack.c.l.b16 %v622
    %v655 = vunpack.c.l.b16 %v623
    %v656 = vpack.c.b16 %v641, %v640
    %v657 = vpack.c.b16 %v643, %v642
    %v658 = vpack.c.b16 %v645, %v644
    %v659 = vpack.c.b16 %v647, %v646
    %v660 = vpack.c.b16 %v649, %v648
    %v661 = vpack.c.b16 %v651, %v650
    %v662 = vpack.c.b16 %v653, %v652
    %v663 = vpack.c.b16 %v655, %v654
    %672 = vmatpush.bf16.msra.mxu0 %v663
    %673 = vmatpush.bf16.msra.mxu0 %v662
    %674 = vmatpush.bf16.msra.mxu0 %v661
    %675 = vmatpush.bf16.msra.mxu0 %v660
    %676 = vmatpush.bf16.msra.mxu0 %v659
    %677 = vmatpush.bf16.msra.mxu0 %v658
    %678 = vmatpush.bf16.msra.mxu0 %v657
    %679 = vmatpush.bf16.msra.mxu0 %v656
    %680 = vmatmul.bf16.gmra.mxu0 %v599
    %v681 = vpop.f32.mrf.mxu0
    %v682 = vadd.f32 0.0, %v681
    %v683 = vpop.f32.mrf.mxu0
    %v684 = vadd.f32 0.0, %v683
    %685 = vmatmul.bf16.gmra.mxu0 %v600
    %v686 = vpop.f32.mrf.mxu0
    %v687 = vadd.f32 0.0, %v686
    %v688 = vpop.f32.mrf.mxu0
    %v689 = vadd.f32 0.0, %v688
    %690 = vmatmul.bf16.gmra.mxu0 %v601
    %v691 = vpop.f32.mrf.mxu0
    %v692 = vadd.f32 0.0, %v691
    %v693 = vpop.f32.mrf.mxu0
    %v694 = vadd.f32 0.0, %v693
    %695 = vmatmul.bf16.gmra.mxu0 %v602
    %v696 = vpop.f32.mrf.mxu0
    %v697 = vadd.f32 0.0, %v696
    %v698 = vpop.f32.mrf.mxu0
    %v699 = vadd.f32 0.0, %v698
    %700 = vmatmul.bf16.gmra.mxu0 %v603
    %v701 = vpop.f32.mrf.mxu0
    %v702 = vadd.f32 0.0, %v701
    %v703 = vpop.f32.mrf.mxu0
    %v704 = vadd.f32 0.0, %v703
    %705 = vmatmul.bf16.gmra.mxu0 %v604
    %v706 = vpop.f32.mrf.mxu0
    %v707 = vadd.f32 0.0, %v706
    %v708 = vpop.f32.mrf.mxu0
    %v709 = vadd.f32 0.0, %v708
    %710 = vmatmul.bf16.gmra.mxu0 %v605
    %v711 = vpop.f32.mrf.mxu0
    %v712 = vadd.f32 0.0, %v711
    %v713 = vpop.f32.mrf.mxu0
    %v714 = vadd.f32 0.0, %v713
    %715 = vmatmul.bf16.gmra.mxu0 %v606
    %v716 = vpop.f32.mrf.mxu0
    %v717 = vadd.f32 0.0, %v716
    %v718 = vpop.f32.mrf.mxu0
    %v719 = vadd.f32 0.0, %v718
    %720 = vdwg.mxu0
    %v721 = vpack.c.bf16 %v684, %v682
    %v722 = vpack.c.bf16 %v689, %v687
    %v723 = vpack.c.bf16 %v694, %v692
    %v724 = vpack.c.bf16 %v699, %v697
    %v725 = vpack.c.bf16 %v704, %v702
    %v726 = vpack.c.bf16 %v709, %v707
    %v727 = vpack.c.bf16 %v714, %v712
    %v728 = vpack.c.bf16 %v719, %v717
    %s729 = scalar_lea.vmem [#allocation8], 2
    %v730 = vld [vmem:[%s729] sm:$0x1]
    %v732 = vperm.slane %v730, 0
    %734 = vmatpush.bf16.msra.mxu0 %v728
    %735 = vmatpush.bf16.msra.mxu0 %v727
    %736 = vmatpush.bf16.msra.mxu0 %v726
    %737 = vmatpush.bf16.msra.mxu0 %v725
    %738 = vmatpush.bf16.msra.mxu0 %v724
    %739 = vmatpush.bf16.msra.mxu0 %v723
    %740 = vmatpush.bf16.msra.mxu0 %v722
    %741 = vmatpush.bf16.msra.mxu0 %v721
    %742 = vmatmul.bf16.gmra.mxu0 %v318
    %v743 = vpop.f32.mrf.mxu0
    %v744 = vadd.f32 %v732, %v743
    %v745 = vpop.f32.mrf.mxu0
    %v746 = vadd.f32 %v732, %v745
    %747 = vmatmul.bf16.gmra.mxu0 %v319
    %v748 = vpop.f32.mrf.mxu0
    %v749 = vadd.f32 %v732, %v748
    %v750 = vpop.f32.mrf.mxu0
    %v751 = vadd.f32 %v732, %v750
    %752 = vmatmul.bf16.gmra.mxu0 %v320
    %v753 = vpop.f32.mrf.mxu0
    %v754 = vadd.f32 %v732, %v753
    %v755 = vpop.f32.mrf.mxu0
    %v756 = vadd.f32 %v732, %v755
    %757 = vmatmul.bf16.gmra.mxu0 %v321
    %v758 = vpop.f32.mrf.mxu0
    %v759 = vadd.f32 %v732, %v758
    %v760 = vpop.f32.mrf.mxu0
    %v761 = vadd.f32 %v732, %v760
    %762 = vmatmul.bf16.gmra.mxu0 %v322
    %v763 = vpop.f32.mrf.mxu0
    %v764 = vadd.f32 %v732, %v763
    %v765 = vpop.f32.mrf.mxu0
    %v766 = vadd.f32 %v732, %v765
    %767 = vmatmul.bf16.gmra.mxu0 %v323
    %v768 = vpop.f32.mrf.mxu0
    %v769 = vadd.f32 %v732, %v768
    %v770 = vpop.f32.mrf.mxu0
    %v771 = vadd.f32 %v732, %v770
    %772 = vmatmul.bf16.gmra.mxu0 %v324
    %v773 = vpop.f32.mrf.mxu0
    %v774 = vadd.f32 %v732, %v773
    %v775 = vpop.f32.mrf.mxu0
    %v776 = vadd.f32 %v732, %v775
    %777 = vmatmul.bf16.gmra.mxu0 %v325
    %v778 = vpop.f32.mrf.mxu0
    %v779 = vadd.f32 %v732, %v778
    %v780 = vpop.f32.mrf.mxu0
    %v781 = vadd.f32 %v732, %v780
    %782 = vdwg.mxu0
    %v783 = vmax.f32 %v744, 0.0
    %v784 = vmax.f32 %v746, 0.0
    %v785 = vmax.f32 %v749, 0.0
    %v786 = vmax.f32 %v751, 0.0
    %v787 = vmax.f32 %v754, 0.0
    %v788 = vmax.f32 %v756, 0.0
    %v789 = vmax.f32 %v759, 0.0
    %v790 = vmax.f32 %v761, 0.0
    %v791 = vmax.f32 %v764, 0.0
    %v792 = vmax.f32 %v766, 0.0
    %v793 = vmax.f32 %v769, 0.0
    %v794 = vmax.f32 %v771, 0.0
    %v795 = vmax.f32 %v774, 0.0
    %v796 = vmax.f32 %v776, 0.0
    %v797 = vmax.f32 %v779, 0.0
    %v798 = vmax.f32 %v781, 0.0
    %v799 = vpack.c.bf16 %v784, %v783
    %v800 = vpack.c.bf16 %v786, %v785
    %v801 = vpack.c.bf16 %v788, %v787
    %v802 = vpack.c.bf16 %v790, %v789
    %v803 = vpack.c.bf16 %v792, %v791
    %v804 = vpack.c.bf16 %v794, %v793
    %v805 = vpack.c.bf16 %v796, %v795
    %v806 = vpack.c.bf16 %v798, %v797
    %s807 = scalar_lea.vmem [#allocation7], 192
    %v808 = vld [vmem:[%s807] sm:$0xf]
    %v809 = vld [vmem:[%s807 + $0x4] sm:$0xf]
    %v810 = vld [vmem:[%s807 + $0x8] sm:$0xf]
    %v811 = vld [vmem:[%s807 + $0xc] sm:$0xf]
    %v812 = vld [vmem:[%s807 + $0x10] sm:$0xf]
    %v813 = vld [vmem:[%s807 + $0x14] sm:$0xf]
    %v814 = vld [vmem:[%s807 + $0x18] sm:$0xf]
    %v815 = vld [vmem:[%s807 + $0x1c] sm:$0xf]
    %v816 = vld [vmem:[%s807 + $0x20] sm:$0xf]
    %v817 = vld [vmem:[%s807 + $0x24] sm:$0xf]
    %v818 = vld [vmem:[%s807 + $0x28] sm:$0xf]
    %v819 = vld [vmem:[%s807 + $0x2c] sm:$0xf]
    %v820 = vld [vmem:[%s807 + $0x30] sm:$0xf]
    %v821 = vld [vmem:[%s807 + $0x34] sm:$0xf]
    %v822 = vld [vmem:[%s807 + $0x38] sm:$0xf]
    %v823 = vld [vmem:[%s807 + $0x3c] sm:$0xf]
    %s824 = scalar_lea.vmem [#allocation8], 3
    %v825 = vld [vmem:[%s824] sm:$0x1]
    %v827 = vperm.slane %v825, 0
    %v845 = vunpack.c.l.b16 %v808
    %v846 = vunpack.c.l.b16 %v809
    %v847 = vunpack.c.l.b16 %v810
    %v848 = vunpack.c.l.b16 %v811
    %v849 = vunpack.c.l.b16 %v812
    %v850 = vunpack.c.l.b16 %v813
    %v851 = vunpack.c.l.b16 %v814
    %v852 = vunpack.c.l.b16 %v815
    %v853 = vunpack.c.l.b16 %v816
    %v854 = vunpack.c.l.b16 %v817
    %v855 = vunpack.c.l.b16 %v818
    %v856 = vunpack.c.l.b16 %v819
    %v857 = vunpack.c.l.b16 %v820
    %v858 = vunpack.c.l.b16 %v821
    %v859 = vunpack.c.l.b16 %v822
    %v860 = vunpack.c.l.b16 %v823
    %v861 = vpack.c.b16 %v846, %v845
    %v862 = vpack.c.b16 %v848, %v847
    %v863 = vpack.c.b16 %v850, %v849
    %v864 = vpack.c.b16 %v852, %v851
    %v865 = vpack.c.b16 %v854, %v853
    %v866 = vpack.c.b16 %v856, %v855
    %v867 = vpack.c.b16 %v858, %v857
    %v868 = vpack.c.b16 %v860, %v859
    %877 = vmatpush.bf16.msra.mxu0 %v868
    %878 = vmatpush.bf16.msra.mxu0 %v867
    %879 = vmatpush.bf16.msra.mxu0 %v866
    %880 = vmatpush.bf16.msra.mxu0 %v865
    %881 = vmatpush.bf16.msra.mxu0 %v864
    %882 = vmatpush.bf16.msra.mxu0 %v863
    %883 = vmatpush.bf16.msra.mxu0 %v862
    %884 = vmatpush.bf16.msra.mxu0 %v861
    %885 = vmatmul.bf16.gmra.mxu0 %v799
    %v886 = vpop.f32.mrf.mxu0
    %v887 = vadd.f32 %v827, %v886
    %v888 = vpop.f32.mrf.mxu0
    %v889 = vadd.f32 %v827, %v888
    %890 = vmatmul.bf16.gmra.mxu0 %v800
    %v891 = vpop.f32.mrf.mxu0
    %v892 = vadd.f32 %v827, %v891
    %v893 = vpop.f32.mrf.mxu0
    %v894 = vadd.f32 %v827, %v893
    %895 = vmatmul.bf16.gmra.mxu0 %v801
    %v896 = vpop.f32.mrf.mxu0
    %v897 = vadd.f32 %v827, %v896
    %v898 = vpop.f32.mrf.mxu0
    %v899 = vadd.f32 %v827, %v898
    %900 = vmatmul.bf16.gmra.mxu0 %v802
    %v901 = vpop.f32.mrf.mxu0
    %v902 = vadd.f32 %v827, %v901
    %v903 = vpop.f32.mrf.mxu0
    %v904 = vadd.f32 %v827, %v903
    %905 = vmatmul.bf16.gmra.mxu0 %v803
    %v906 = vpop.f32.mrf.mxu0
    %v907 = vadd.f32 %v827, %v906
    %v908 = vpop.f32.mrf.mxu0
    %v909 = vadd.f32 %v827, %v908
    %910 = vmatmul.bf16.gmra.mxu0 %v804
    %v911 = vpop.f32.mrf.mxu0
    %v912 = vadd.f32 %v827, %v911
    %v913 = vpop.f32.mrf.mxu0
    %v914 = vadd.f32 %v827, %v913
    %915 = vmatmul.bf16.gmra.mxu0 %v805
    %v916 = vpop.f32.mrf.mxu0
    %v917 = vadd.f32 %v827, %v916
    %v918 = vpop.f32.mrf.mxu0
    %v919 = vadd.f32 %v827, %v918
    %920 = vmatmul.bf16.gmra.mxu0 %v806
    %v921 = vpop.f32.mrf.mxu0
    %v922 = vadd.f32 %v827, %v921
    %v923 = vpop.f32.mrf.mxu0
    %v924 = vadd.f32 %v827, %v923
    %925 = vdwg.mxu0
    %926 = vst [vmem:[#allocation10] sm:$0xff] %v887
    %927 = vst [vmem:[#allocation10 + $0x8] sm:$0xff] %v889
    %928 = vst [vmem:[#allocation10 + $0x10] sm:$0xff] %v892
    %929 = vst [vmem:[#allocation10 + $0x18] sm:$0xff] %v894
    %930 = vst [vmem:[#allocation10 + $0x20] sm:$0xff] %v897
    %931 = vst [vmem:[#allocation10 + $0x28] sm:$0xff] %v899
    %932 = vst [vmem:[#allocation10 + $0x30] sm:$0xff] %v902
    %933 = vst [vmem:[#allocation10 + $0x38] sm:$0xff] %v904
    %934 = vst [vmem:[#allocation10 + $0x40] sm:$0xff] %v907
    %935 = vst [vmem:[#allocation10 + $0x48] sm:$0xff] %v909
    %936 = vst [vmem:[#allocation10 + $0x50] sm:$0xff] %v912
    %937 = vst [vmem:[#allocation10 + $0x58] sm:$0xff] %v914
    %938 = vst [vmem:[#allocation10 + $0x60] sm:$0xff] %v917
    %939 = vst [vmem:[#allocation10 + $0x68] sm:$0xff] %v919
    %940 = vst [vmem:[#allocation10 + $0x70] sm:$0xff] %v922
    %941 = vst [vmem:[#allocation10 + $0x78] sm:$0xff] %v924
    // Predicated region
    $region34: #{tpu_custom_call.1} parent=1 // pred_check
      _
    $region35: #{tpu_custom_call.1} parent=1 // pred_check_branch
      %943 = sbr.rel (0) target = $region37
    $region36: #{tpu_custom_call.1} parent=1 // pred_region
      %945 = vsyncadd [#allocation4], 0
      %s946 = sshll.u32 [#allocation10], 4
      %s947 = int_to_ptr.vmem [resolvable:$true] %s946
      %s948 = sshll.u32 %s4, 4
      %s949 = int_to_ptr.hbm [resolvable:$true] %s948
      %954 = dma.vmem_to_hbm [thread:$0]  %s947, 2048, %s949, [#allocation4], 128, 128, 8
    $region37: #{tpu_custom_call.1} parent=1 // pred_fallthru
      _
    // Predicated region
    $region38: #{tpu_custom_call.1} parent=1 // pred_check
      _
    $region39: #{tpu_custom_call.1} parent=1 // pred_check_branch
      %956 = sbr.rel (0) target = $region41
    $region40: #{tpu_custom_call.1} parent=1 // pred_region
      %958 = dma.done [#allocation4], 2048
    $region41: #{tpu_custom_call.1} parent=1 // pred_fallthru
      _
    %959 = vsyncpa [#allocation3], 1
    %960 = vsyncpa [#allocation6], 1
    %961 = vsyncpa [#allocation9], 1
    %962 = vsyncpa [#allocation4], 1

</llo_original>
